<compile_context>
chip_gen: v7x
topology: tpu7x:2x2x1
jax: 0.10.0
libtpu: 0.0.40
codegen_flags: <defaults>
</compile_context>

<pallas_src>
import jax
import jax.numpy as jnp
from jax.experimental import pallas as pl
from jax.experimental.pallas import tpu as pltpu


def _linear_kernel(x_ref, w_ref, b_ref, o_ref):
    """One (tm, tn) output tile; full K resident in the block (no K loop)."""
    # x arrives f32 and is cast to bf16 in-register (saves a separate XLA
    # cast pass over HBM); weights are already bf16; accumulate in f32 on
    # the MXU.  NOTE: bf16 operands are a small precision change vs. a pure
    # f32 nn.Linear (matches to ~1e-2); flip the cast off if f32 accuracy is
    # required.
    acc = jnp.dot(
        x_ref[...].astype(jnp.bfloat16),
        w_ref[...],
        preferred_element_type=jnp.float32,
    )
    # Bias added exactly once per output tile; single (lane-dense) store.
    o_ref[...] = (acc + b_ref[...]).astype(o_ref.dtype)


def pallas_linear(x, w_bf16, b_f32, *, tm=128, tn=256, out_dtype=jnp.float32):
    """y = x @ w + b with a tiled (M, N) Pallas kernel (K collapsed).

    x:      [M, K]  float32 activations (cast to bf16 inside the kernel)
    w_bf16: [K, N]  bfloat16 weights (cast once at param init, not per call)
    b_f32:  [1, N]  float32 bias
    """
    M, K = x.shape
    Kw, N = w_bf16.shape
    assert K == Kw, (K, Kw)
    assert b_f32.shape == (1, N), b_f32.shape

    # Clamp tiles to the problem and require exact divisibility so every
    # block (incl. the output) is fully lane/sublane dense.
    tm = min(tm, M)
    tn = min(tn, N)
    assert M % tm == 0 and N % tn == 0, (M, N, tm, tn)
    assert tm % 8 == 0 and tn % 128 == 0 and K % 128 == 0, (tm, tn, K)

    grid = (M // tm, N // tn)
    gm, gn = grid

    # Bytes computed from the grid: x is re-read once per N tile, w once per
    # M tile, bias once per M tile, output written once.
    cost = pl.CostEstimate(
        flops=2 * M * N * K,
        transcendentals=0,
        bytes_accessed=(
            gn * M * K * x.dtype.itemsize
            + gm * K * N * w_bf16.dtype.itemsize
            + gm * N * b_f32.dtype.itemsize
            + M * N * jnp.dtype(out_dtype).itemsize
        ),
    )

    return pl.pallas_call(
        _linear_kernel,
        out_shape=jax.ShapeDtypeStruct((M, N), out_dtype),
        grid=grid,
        in_specs=[
            pl.BlockSpec((tm, K), lambda i, j: (i, 0)),
            pl.BlockSpec((K, tn), lambda i, j: (0, j)),
            pl.BlockSpec((1, tn), lambda i, j: (0, j)),
        ],
        out_specs=pl.BlockSpec((tm, tn), lambda i, j: (i, j)),
        compiler_params=pltpu.CompilerParams(
            dimension_semantics=("parallel", "parallel"),
        ),
        cost_estimate=cost,
    )(x, w_bf16, b_f32)


class Model:
    """JAX/Pallas port of the PyTorch wrapper Model."""

    def __init__(self, model_fn):
        self.model = model_fn

    def __call__(self, inputs):
        # Mirrors `print(inputs)` in the PyTorch forward.  We run eagerly
        # (not under jit), so a host print is the faithful equivalent; under
        # jit you'd switch to jax.debug.print to avoid a device->host sync.
        print(inputs)
        return self.model(inputs)


if __name__ == "__main__":
    key = jax.random.PRNGKey(0)

    # Small but TPU-aligned shapes: lane-dense output (multiple of 128) and
    # M//tm == 2 so the parallel axis has >=2 blocks (both v7x TCs get work).
    batch, hidden_in, hidden_out = 256, 256, 256

    kx, kw, kb = jax.random.split(key, 3)
    x = jax.random.normal(kx, (batch, hidden_in), dtype=jnp.float32)

    # Deterministic stand-in parameters for the unspecified inner model.
    # Casts hoisted to param init (done exactly once, not per call).
    w = jax.random.normal(kw, (hidden_in, hidden_out), dtype=jnp.float32) * (
        1.0 / jnp.sqrt(hidden_in)
    )
    bias = jax.random.normal(kb, (1, hidden_out), dtype=jnp.float32) * 0.01
    w_bf16 = w.astype(jnp.bfloat16)
    b_f32 = bias.astype(jnp.float32)

    inner_model = lambda inp: pallas_linear(inp, w_bf16, b_f32)
    model = Model(inner_model)

    out = model(x)
    out = jax.block_until_ready(out)

    # Reference with the same operand precision (bf16 operands, f32 accumulate).
    ref = (
        jnp.dot(
            x.astype(jnp.bfloat16),
            w_bf16,
            preferred_element_type=jnp.float32,
        )
        + b_f32
    )
    assert out.shape == (batch, hidden_out)
    assert jnp.allclose(out, ref, atol=2e-2, rtol=2e-2), (
        float(jnp.max(jnp.abs(out - ref)))
    )

    print("KERNEL_OK")
</pallas_src>

<mosaic_0001>
module attributes {stable_mosaic.version = 11 : i64} {
  func.func @_linear_kernel(%arg0: i32, %arg1: i32, %arg2: memref<128x256xf32, #tpu.memory_space<vmem>>, %arg3: memref<256x256xbf16, #tpu.memory_space<vmem>>, %arg4: memref<1x256xf32, #tpu.memory_space<vmem>>, %arg5: memref<128x256xf32, #tpu.memory_space<vmem>>) attributes {dimension_semantics = [#tpu.dimension_semantics<parallel>, #tpu.dimension_semantics<parallel>], iteration_bounds = array<i64: 2, 1>, scalar_prefetch = 0 : i64, scratch_operands = 0 : i64, tpu.core_type = #tpu.core_type<tc>, window_params = [{transform_indices = @transform_0, window_bounds = array<i64: 128, 256>}, {transform_indices = @transform_1, window_bounds = array<i64: 256, 256>}, {transform_indices = @transform_2, window_bounds = array<i64: 1, 256>}, {transform_indices = @transform_3, window_bounds = array<i64: 128, 256>}]} {
    %c0 = arith.constant 0 : index
    %c0_0 = arith.constant 0 : index
    %0 = vector.load %arg2[%c0, %c0_0] : memref<128x256xf32, #tpu.memory_space<vmem>>, vector<128x256xf32>
    %1 = arith.truncf %0 : vector<128x256xf32> to vector<128x256xbf16>
    %c0_1 = arith.constant 0 : index
    %c0_2 = arith.constant 0 : index
    %2 = vector.load %arg3[%c0_1, %c0_2] : memref<256x256xbf16, #tpu.memory_space<vmem>>, vector<256x256xbf16>
    %cst = arith.constant dense<0.000000e+00> : vector<128x256xf32>
    %3 = tpu.matmul %1, %2, %cst {dimension_numbers = #tpu.dot_dimension_numbers<[1], [0], [0], [1], [0, 0, 1, 1], [], []>} : vector<128x256xbf16>, vector<256x256xbf16>, vector<128x256xf32> -> vector<128x256xf32>
    %c0_3 = arith.constant 0 : index
    %c0_4 = arith.constant 0 : index
    %4 = vector.load %arg4[%c0_3, %c0_4] : memref<1x256xf32, #tpu.memory_space<vmem>>, vector<1x256xf32>
    %5 = vector.broadcast %4 : vector<1x256xf32> to vector<128x256xf32>
    %6 = arith.addf %3, %5 : vector<128x256xf32>
    %c0_5 = arith.constant 0 : index
    %c0_6 = arith.constant 0 : index
    %7 = vector.load %arg5[%c0_5, %c0_6] : memref<128x256xf32, #tpu.memory_space<vmem>>, vector<128x256xf32>
    tpu.vector_store %arg5[%c0_5, %c0_6], %6 {strides = array<i32>} : memref<128x256xf32, #tpu.memory_space<vmem>>, vector<128x256xf32>,
    return
  }
  func.func @transform_0(%arg0: i32, %arg1: i32) -> (i32, i32) {
    %c0_i32 = arith.constant 0 : i32
    %c0_i32_0 = arith.constant 0 : i32
    return %arg0, %c0_i32 : i32, i32
  }
  func.func @transform_1(%arg0: i32, %arg1: i32) -> (i32, i32) {
    %c0_i32 = arith.constant 0 : i32
    %c0_i32_0 = arith.constant 0 : i32
    return %c0_i32, %arg1 : i32, i32
  }
  func.func @transform_2(%arg0: i32, %arg1: i32) -> (i32, i32) {
    %c0_i32 = arith.constant 0 : i32
    %c0_i32_0 = arith.constant 0 : i32
    return %c0_i32, %arg1 : i32, i32
  }
  func.func @transform_3(%arg0: i32, %arg1: i32) -> (i32, i32) {
    %c0_i32 = arith.constant 0 : i32
    return %arg0, %arg1 : i32, i32
  }
}

</mosaic_0001>

<llo_original>
// kernel: tpu_custom_call.1
$region0: #{tpu_custom_call.1}
  #allocation0 [shape = 'u32[]', space=smem, size = 0x4, offset = 0x4, fixed_abs, tag = 'smem constant byte address 0x4 - core index']
  #allocation1 [shape = 'u32[144,128]{1,0:T(1,128)}', space=vmem, size = 0x12000, scoped, tag = 'internal scratch']
  %s0 = inlined_call_operand.hbm [shape: f32[256,256], index: 0, kind: input, shape index: {}]
  %s1 = inlined_call_operand.hbm [shape: bf16[256,256], index: 1, kind: input, shape index: {}]
  %s2 = inlined_call_operand.vmem [shape: f32[1,256], index: 2, kind: input, shape index: {}]
  %s3 = inlined_call_operand.hbm [shape: f32[256,256], index: 3, kind: output, shape index: {}]
  %s4 = sld [smem:[#allocation0]]
  $region53: #{tpu_custom_call.1} parent=0
    _
  %s6 = ssub.s32 1, %s4
  %s7 = scalar_select 0, %s6, %s4
  $region1: #{tpu_custom_call.1} parent=0
    #allocation2 [shape = 'u8[262144]{0}', space=vmem, size = 0x40000, scoped, tag = 'input window, operand 0']
    #allocation3 [shape = 's32[2]{0}', space=sflag, size = 0x8, scoped, tag = 'scoped memory for tpu_custom_call.1']
    #allocation4 [shape = 's32[2]{0}', space=sflag, size = 0x8, scoped, tag = 'scoped memory for tpu_custom_call.1']
    #allocation5 [shape = 'u8[131072]{0}', space=vmem, size = 0x20000, scoped, tag = 'input window, operand 1, single buffered']
    #allocation6 [shape = 's32[1]{0}', space=sflag, size = 0x4, scoped, tag = 'scoped memory for tpu_custom_call.1']
    #allocation7 [shape = 'u8[262144]{0}', space=vmem, size = 0x40000, scoped, tag = 'output window, operand 0']
    %8 = vsyncpa [#allocation3], 0
    %s9 = scalar_lea.sflag [#allocation3], 1
    %10 = vsyncpa %s9, 0
    %11 = vsyncpa [#allocation6], 0
    %12 = vsyncpa [#allocation4], 0
    %s13 = scalar_lea.sflag [#allocation4], 1
    %14 = vsyncpa %s13, 0
    loop: start=0, step=1, limit=4
    $region2: #{tpu_custom_call.1} parent=1 // loop_pre_header
      _
    $region3: #{tpu_custom_call.1} parent=1 // loop_header
      %s16 = sphi 0, %s20
      %p17 = scmp.ge.s32.totalorder %s16, 4
      %s23 = sphi 0, %s35
      %s24 = sphi 0, %s31
      %s25 = sphi 0, %s23
      %s26 = sphi 0, %s24
      %s27 = sphi 0, %s25
      %s28 = sphi 0, %s26
      %s38 = sphi 0, %s40
      %s41 = sphi 0, %s38
      %s42 = sphi 0, %s41
      %s58 = sphi 0, %s42
      %s64 = sphi 0, %s66
      %s67 = sphi 0, %s64
      %s68 = sphi 0, %s67
      %s84 = sphi 0, %s68
      %s90 = sphi 0, %s92
      %s93 = sphi 0, %s90
      %s94 = sphi 0, %s93
      %s110 = sphi 0, %s94
      %s118 = sphi 0, %s120
      %s121 = sphi 0, %s118
      %s122 = sphi 0, %s121
      %s138 = sphi 0, %s122
    $region4: #{tpu_custom_call.1} parent=1 // loop_header_branch
      %19 = sbr.rel (%p17) target = $region8
    $region5: #{tpu_custom_call.1} parent=1 // loop_body
      %s21 = ssub.s32 %s16, 1
      %s22 = ssub.s32 %s16, 2
      %s29 = sadd.s32 1, %s24
      %p30 = scmp.ge.s32.totalorder %s29, 1
      %s31 = scalar_select %p30, 0, %s29
      %s32 = sadd.s32 1, %s23
      %s33 = scalar_select %p30, %s32, %s23
      %p34 = scmp.ge.s32.totalorder %s33, 2
      %s35 = scalar_select %p34, 0, %s33
      %s36 = ssub.s32 %s23, %s35
      %p37 = scmp.eq.s32.totalorder %s36, 0
      %s39 = sadd.s32 %s38, 1
      %s40 = scalar_select %p37, %s38, %s39
      %p43 = pneg %p37
      %p44 = scmp.eq.s32.totalorder %s16, 1
      %p45 = por %p43, %p44
      %p46 = scmp.ne.s32.totalorder %s38, %s41
      %p47 = scmp.eq.s32.totalorder %s16, 0
      %p48 = por %p46, %p47
      %p49 = scmp.ne.s32.totalorder %s38, %s41
      %p50 = scmp.eq.s32.totalorder %s21, 1
      %p51 = por %p49, %p50
      %p52 = scmp.ne.s32.totalorder %s41, %s42
      %p53 = scmp.eq.s32.totalorder %s21, 0
      %p54 = por %p52, %p53
      %p55 = scmp.ne.s32.totalorder %s41, %s42
      %p56 = scmp.eq.s32.totalorder %s22, 1
      %p57 = por %p55, %p56
      %p59 = scmp.ne.s32.totalorder %s42, %s58
      %p60 = scmp.eq.s32.totalorder %s22, 0
      %p61 = por %p59, %p60
      %s62 = ssub.s32 %s24, %s31
      %p63 = scmp.eq.s32.totalorder %s62, 0
      %s65 = sadd.s32 %s64, 1
      %s66 = scalar_select %p63, %s64, %s65
      %p69 = pneg %p63
      %p70 = scmp.eq.s32.totalorder %s16, 1
      %p71 = por %p69, %p70
      %p72 = scmp.ne.s32.totalorder %s64, %s67
      %p73 = scmp.eq.s32.totalorder %s16, 0
      %p74 = por %p72, %p73
      %p75 = scmp.ne.s32.totalorder %s64, %s67
      %p76 = scmp.eq.s32.totalorder %s21, 1
      %p77 = por %p75, %p76
      %p78 = scmp.ne.s32.totalorder %s67, %s68
      %p79 = scmp.eq.s32.totalorder %s21, 0
      %p80 = por %p78, %p79
      %p81 = scmp.ne.s32.totalorder %s67, %s68
      %p82 = scmp.eq.s32.totalorder %s22, 1
      %p83 = por %p81, %p82
      %p85 = scmp.ne.s32.totalorder %s68, %s84
      %p86 = scmp.eq.s32.totalorder %s22, 0
      %p87 = por %p85, %p86
      %s88 = ssub.s32 %s24, %s31
      %p89 = scmp.eq.s32.totalorder %s88, 0
      %s91 = sadd.s32 %s90, 1
      %s92 = scalar_select %p89, %s90, %s91
      %p95 = pneg %p89
      %p96 = scmp.eq.s32.totalorder %s16, 1
      %p97 = por %p95, %p96
      %p98 = scmp.ne.s32.totalorder %s90, %s93
      %p99 = scmp.eq.s32.totalorder %s16, 0
      %p100 = por %p98, %p99
      %p101 = scmp.ne.s32.totalorder %s90, %s93
      %p102 = scmp.eq.s32.totalorder %s21, 1
      %p103 = por %p101, %p102
      %p104 = scmp.ne.s32.totalorder %s93, %s94
      %p105 = scmp.eq.s32.totalorder %s21, 0
      %p106 = por %p104, %p105
      %p107 = scmp.ne.s32.totalorder %s93, %s94
      %p108 = scmp.eq.s32.totalorder %s22, 1
      %p109 = por %p107, %p108
      %p111 = scmp.ne.s32.totalorder %s94, %s110
      %p112 = scmp.eq.s32.totalorder %s22, 0
      %p113 = por %p111, %p112
      %s114 = ssub.s32 %s23, %s35
      %s115 = ssub.s32 %s24, %s31
      %s116 = sor.u32 %s114, %s115
      %p117 = scmp.eq.s32.totalorder %s116, 0
      %s119 = sadd.s32 %s118, 1
      %s120 = scalar_select %p117, %s118, %s119
      %p123 = pneg %p117
      %p124 = scmp.eq.s32.totalorder %s16, 1
      %p125 = por %p123, %p124
      %p126 = scmp.ne.s32.totalorder %s118, %s121
      %p127 = scmp.eq.s32.totalorder %s16, 0
      %p128 = por %p126, %p127
      %p129 = scmp.ne.s32.totalorder %s118, %s121
      %p130 = scmp.eq.s32.totalorder %s21, 1
      %p131 = por %p129, %p130
      %p132 = scmp.ne.s32.totalorder %s121, %s122
      %p133 = scmp.eq.s32.totalorder %s21, 0
      %p134 = por %p132, %p133
      %p135 = scmp.ne.s32.totalorder %s121, %s122
      %p136 = scmp.eq.s32.totalorder %s22, 1
      %p137 = por %p135, %p136
      %p139 = scmp.ne.s32.totalorder %s122, %s138
      %p140 = scmp.eq.s32.totalorder %s22, 0
      %p141 = por %p139, %p140
      %p142 = scmp.le.s32.totalorder 1, %s16
      %p143 = scmp.lt.s32.totalorder %s16, 3
      %p144 = pnand %p142, %p143
      %p145 = pneg %p144
      // Predicated region
      $region9: #{tpu_custom_call.1} parent=5 // pred_check
        _
      $region10: #{tpu_custom_call.1} parent=5 // pred_check_branch
        %147 = sbr.rel (%p144) target = $region12
      $region11: #{tpu_custom_call.1} parent=5 // pred_region
        %s148 = ssub.s32 %s16, 1
        // Predicated region
        $region13: #{tpu_custom_call.1} parent=11 // pred_check
          %p149 = pneg %p80
        $region14: #{tpu_custom_call.1} parent=11 // pred_check_branch
          %151 = sbr.rel (%p149) target = $region16
        $region15: #{tpu_custom_call.1} parent=11 // pred_region
          %s152 = smul.u32 2, %s26
          %s154 = ssub.s32 4096, 4096
          %155 = vsyncadd [#allocation6], %s154
          %s156 = smul.addr %s152, 64
          %s157 = scalar_lea.hbm %s1, %s156
          %s158 = sshll.u32 [#allocation5], 4
          %s159 = int_to_ptr.vmem [resolvable:$true] %s158
          %164 = dma.hbm_to_vmem [thread:$0]  %s157, 4096, %s159, [#allocation6], 128, 128, 8
        $region16: #{tpu_custom_call.1} parent=11 // pred_fallthru
          _
        // Predicated region
        $region17: #{tpu_custom_call.1} parent=11 // pred_check
          %p165 = pneg %p106
        $region18: #{tpu_custom_call.1} parent=11 // pred_check_branch
          %167 = sbr.rel (%p165) target = $region20
        $region19: #{tpu_custom_call.1} parent=11 // pred_region
          %s168 = smul.u32 2, %s26
          %p169 = scmp.lt.s32.totalorder %s168, 1
          %s170 = scalar_select %p169, %s168, 1
          %s171 = scalar_lea.vmem %s2, %s170
          %s172 = smul.u32 2, %s26
        $region20: #{tpu_custom_call.1} parent=11 // pred_fallthru
          _
      $region12: #{tpu_custom_call.1} parent=5 // pred_fallthru
        _
      %p173 = scmp.lt.s32.totalorder %s16, 2
      // Predicated region
      $region21: #{tpu_custom_call.1} parent=5 // pred_check
        %p174 = pneg %p173
      $region22: #{tpu_custom_call.1} parent=5 // pred_check_branch
        %176 = sbr.rel (%p174) target = $region24
      $region23: #{tpu_custom_call.1} parent=5 // pred_region
        // Predicated region
        $region25: #{tpu_custom_call.1} parent=23 // pred_check
          %p177 = pneg %p48
        $region26: #{tpu_custom_call.1} parent=23 // pred_check_branch
          %179 = sbr.rel (%p177) target = $region28
        $region27: #{tpu_custom_call.1} parent=23 // pred_region
          %s180 = sand.u32 %s38, 1
          %s181 = scalar_lea.sflag [#allocation3], %s180
          %s182 = sand.u32 %s38, 1
          %s183 = smul.addr %s182, 256
          %s184 = scalar_lea.vmem [#allocation2], %s183
          %s185 = smul.u32 16, %s23
          %s187 = ssub.s32 4096, 4096
          %188 = vsyncadd %s181, %s187
          %s189 = smul.addr %s185, 2
          %s190 = smul.addr %s189, 128
          %s191 = scalar_lea.hbm %s0, %s190
          %s192 = sshll.u32 %s184, 4
          %s193 = int_to_ptr.vmem [resolvable:$true] %s192
          %198 = dma.hbm_to_vmem [thread:$0]  %s191, 4096, %s193, %s181, 256, 256, 16
        $region28: #{tpu_custom_call.1} parent=23 // pred_fallthru
          _
      $region24: #{tpu_custom_call.1} parent=5 // pred_fallthru
        _
      %p199 = scmp.le.s32.totalorder 1, %s16
      %p200 = scmp.lt.s32.totalorder %s16, 3
      %p201 = pnand %p199, %p200
      %p202 = pneg %p201
      // Predicated region
      $region29: #{tpu_custom_call.1} parent=5 // pred_check
        _
      $region30: #{tpu_custom_call.1} parent=5 // pred_check_branch
        %204 = sbr.rel (%p201) target = $region32
      $region31: #{tpu_custom_call.1} parent=5 // pred_region
        %s205 = ssub.s32 %s16, 1
        %s206 = sand.u32 %s41, 1
        %s207 = scalar_lea.sflag [#allocation3], %s206
        %s208 = sand.u32 %s41, 1
        %s209 = smul.addr %s208, 256
        %s210 = scalar_lea.vmem [#allocation2], %s209
        // Predicated region
        $region33: #{tpu_custom_call.1} parent=31 // pred_check
          %p211 = pneg %p54
        $region34: #{tpu_custom_call.1} parent=31 // pred_check_branch
          %213 = sbr.rel (%p211) target = $region36
        $region35: #{tpu_custom_call.1} parent=31 // pred_region
          %214 = dma.done %s207, 4096
        $region36: #{tpu_custom_call.1} parent=31 // pred_fallthru
          _
        // Predicated region
        $region37: #{tpu_custom_call.1} parent=31 // pred_check
          %p215 = pneg %p80
        $region38: #{tpu_custom_call.1} parent=31 // pred_check_branch
          %217 = sbr.rel (%p215) target = $region40
        $region39: #{tpu_custom_call.1} parent=31 // pred_region
          %218 = dma.done [#allocation6], 4096
        $region40: #{tpu_custom_call.1} parent=31 // pred_fallthru
          _
        %s219 = sand.u32 %s41, 1
        %s220 = scalar_lea.sflag [#allocation3], %s219
        %s221 = sand.u32 %s41, 1
        %s222 = smul.addr %s221, 256
        %s223 = scalar_lea.vmem [#allocation2], %s222
        %p224 = pneg %p54
        %p225 = pneg %p51
        %p226 = pneg %p80
        %p227 = pneg %p77
        %s228 = smul.u32 2, %s26
        %p229 = scmp.lt.s32.totalorder %s228, 1
        %s230 = scalar_select %p229, %s228, 1
        %s231 = scalar_lea.vmem %s2, %s230
        %p232 = pneg %p106
        %p233 = pneg %p103
        %p234 = pneg %p134
        %p235 = pneg %p131
        %s236 = sand.u32 %s121, 1
        %s237 = scalar_lea.sflag [#allocation4], %s236
        %s238 = sand.u32 %s121, 1
        %s239 = smul.addr %s238, 256
        %s240 = scalar_lea.vmem [#allocation7], %s239
        %s241 = smul.u32 16, %s25
        %s242 = smul.u32 2, %s26
        %s243 = smul.u32 2, %s26
        %p244 = scmp.lt.s32.totalorder %s243, 1
        %s245 = scalar_select %p244, %s243, 1
        %s246 = scalar_lea.vmem %s2, %s245
        %s247 = smul.u32 2, %s26
        %s248 = smul.u32 16, %s25
        %s249 = smul.u32 2, %s26
        %v250 = vld [vmem:[%s210] sm:$0xff]
        %v251 = vld [vmem:[%s210 + $0x8] sm:$0xff]
        %v252 = vld [vmem:[%s210 + $0x10] sm:$0xff]
        %v253 = vld [vmem:[%s210 + $0x18] sm:$0xff]
        %v254 = vld [vmem:[%s210 + $0x20] sm:$0xff]
        %v255 = vld [vmem:[%s210 + $0x28] sm:$0xff]
        %v256 = vld [vmem:[%s210 + $0x30] sm:$0xff]
        %v257 = vld [vmem:[%s210 + $0x38] sm:$0xff]
        %v258 = vld [vmem:[%s210 + $0x40] sm:$0xff]
        %v259 = vld [vmem:[%s210 + $0x48] sm:$0xff]
        %v260 = vld [vmem:[%s210 + $0x50] sm:$0xff]
        %v261 = vld [vmem:[%s210 + $0x58] sm:$0xff]
        %v262 = vld [vmem:[%s210 + $0x60] sm:$0xff]
        %v263 = vld [vmem:[%s210 + $0x68] sm:$0xff]
        %v264 = vld [vmem:[%s210 + $0x70] sm:$0xff]
        %v265 = vld [vmem:[%s210 + $0x78] sm:$0xff]
        %v266 = vld [vmem:[%s210 + $0x80] sm:$0xff]
        %v267 = vld [vmem:[%s210 + $0x88] sm:$0xff]
        %v268 = vld [vmem:[%s210 + $0x90] sm:$0xff]
        %v269 = vld [vmem:[%s210 + $0x98] sm:$0xff]
        %v270 = vld [vmem:[%s210 + $0xa0] sm:$0xff]
        %v271 = vld [vmem:[%s210 + $0xa8] sm:$0xff]
        %v272 = vld [vmem:[%s210 + $0xb0] sm:$0xff]
        %v273 = vld [vmem:[%s210 + $0xb8] sm:$0xff]
        %v274 = vld [vmem:[%s210 + $0xc0] sm:$0xff]
        %v275 = vld [vmem:[%s210 + $0xc8] sm:$0xff]
        %v276 = vld [vmem:[%s210 + $0xd0] sm:$0xff]
        %v277 = vld [vmem:[%s210 + $0xd8] sm:$0xff]
        %v278 = vld [vmem:[%s210 + $0xe0] sm:$0xff]
        %v279 = vld [vmem:[%s210 + $0xe8] sm:$0xff]
        %v280 = vld [vmem:[%s210 + $0xf0] sm:$0xff]
        %v281 = vld [vmem:[%s210 + $0xf8] sm:$0xff]
        %v282 = vpack.c.bf16 %v252, %v250
        %v283 = vpack.c.bf16 %v253, %v251
        %v284 = vpack.c.bf16 %v256, %v254
        %v285 = vpack.c.bf16 %v257, %v255
        %v286 = vpack.c.bf16 %v260, %v258
        %v287 = vpack.c.bf16 %v261, %v259
        %v288 = vpack.c.bf16 %v264, %v262
        %v289 = vpack.c.bf16 %v265, %v263
        %v290 = vpack.c.bf16 %v268, %v266
        %v291 = vpack.c.bf16 %v269, %v267
        %v292 = vpack.c.bf16 %v272, %v270
        %v293 = vpack.c.bf16 %v273, %v271
        %v294 = vpack.c.bf16 %v276, %v274
        %v295 = vpack.c.bf16 %v277, %v275
        %v296 = vpack.c.bf16 %v280, %v278
        %v297 = vpack.c.bf16 %v281, %v279
        %v298 = vld [vmem:[#allocation5] sm:$0xff]
        %v299 = vld [vmem:[#allocation5 + $0x8] sm:$0xff]
        %v300 = vld [vmem:[#allocation5 + $0x10] sm:$0xff]
        %v301 = vld [vmem:[#allocation5 + $0x18] sm:$0xff]
        %v302 = vld [vmem:[#allocation5 + $0x20] sm:$0xff]
        %v303 = vld [vmem:[#allocation5 + $0x28] sm:$0xff]
        %v304 = vld [vmem:[#allocation5 + $0x30] sm:$0xff]
        %v305 = vld [vmem:[#allocation5 + $0x38] sm:$0xff]
        %v306 = vld [vmem:[#allocation5 + $0x40] sm:$0xff]
        %v307 = vld [vmem:[#allocation5 + $0x48] sm:$0xff]
        %v308 = vld [vmem:[#allocation5 + $0x50] sm:$0xff]
        %v309 = vld [vmem:[#allocation5 + $0x58] sm:$0xff]
        %v310 = vld [vmem:[#allocation5 + $0x60] sm:$0xff]
        %v311 = vld [vmem:[#allocation5 + $0x68] sm:$0xff]
        %v312 = vld [vmem:[#allocation5 + $0x70] sm:$0xff]
        %v313 = vld [vmem:[#allocation5 + $0x78] sm:$0xff]
        %v314 = vld [vmem:[#allocation5 + $0x80] sm:$0xff]
        %v315 = vld [vmem:[#allocation5 + $0x88] sm:$0xff]
        %v316 = vld [vmem:[#allocation5 + $0x90] sm:$0xff]
        %v317 = vld [vmem:[#allocation5 + $0x98] sm:$0xff]
        %v318 = vld [vmem:[#allocation5 + $0xa0] sm:$0xff]
        %v319 = vld [vmem:[#allocation5 + $0xa8] sm:$0xff]
        %v320 = vld [vmem:[#allocation5 + $0xb0] sm:$0xff]
        %v321 = vld [vmem:[#allocation5 + $0xb8] sm:$0xff]
        %v322 = vld [vmem:[#allocation5 + $0xc0] sm:$0xff]
        %v323 = vld [vmem:[#allocation5 + $0xc8] sm:$0xff]
        %v324 = vld [vmem:[#allocation5 + $0xd0] sm:$0xff]
        %v325 = vld [vmem:[#allocation5 + $0xd8] sm:$0xff]
        %v326 = vld [vmem:[#allocation5 + $0xe0] sm:$0xff]
        %v327 = vld [vmem:[#allocation5 + $0xe8] sm:$0xff]
        %v328 = vld [vmem:[#allocation5 + $0xf0] sm:$0xff]
        %v329 = vld [vmem:[#allocation5 + $0xf8] sm:$0xff]
        %v330 = vld [vmem:[%s246] sm:$0x3]
        %v332 = vlaneseq
        %v333 = vshrl.u32 %v332, 7
        %v334 = vsub.s32 0, %v333
        %v335 = vrot.slane %v330, %v334
        %v336 = vlaneseq
        %v337 = vshrl.u32 %v336, 7
        %v338 = vsub.s32 1, %v337
        %v339 = vrot.slane %v330, %v338
        %v374 = vunpack.c.l.b16 %v298
        %v375 = vunpack.c.h.b16 %v298
        %v376 = vunpack.c.l.b16 %v299
        %v377 = vunpack.c.h.b16 %v299
        %v378 = vunpack.c.l.b16 %v300
        %v379 = vunpack.c.h.b16 %v300
        %v380 = vunpack.c.l.b16 %v301
        %v381 = vunpack.c.h.b16 %v301
        %v382 = vunpack.c.l.b16 %v302
        %v383 = vunpack.c.h.b16 %v302
        %v384 = vunpack.c.l.b16 %v303
        %v385 = vunpack.c.h.b16 %v303
        %v386 = vunpack.c.l.b16 %v304
        %v387 = vunpack.c.h.b16 %v304
        %v388 = vunpack.c.l.b16 %v305
        %v389 = vunpack.c.h.b16 %v305
        %v390 = vunpack.c.l.b16 %v306
        %v391 = vunpack.c.h.b16 %v306
        %v392 = vunpack.c.l.b16 %v307
        %v393 = vunpack.c.h.b16 %v307
        %v394 = vunpack.c.l.b16 %v308
        %v395 = vunpack.c.h.b16 %v308
        %v396 = vunpack.c.l.b16 %v309
        %v397 = vunpack.c.h.b16 %v309
        %v398 = vunpack.c.l.b16 %v310
        %v399 = vunpack.c.h.b16 %v310
        %v400 = vunpack.c.l.b16 %v311
        %v401 = vunpack.c.h.b16 %v311
        %v402 = vunpack.c.l.b16 %v312
        %v403 = vunpack.c.h.b16 %v312
        %v404 = vunpack.c.l.b16 %v313
        %v405 = vunpack.c.h.b16 %v313
        %v406 = vunpack.c.l.b16 %v314
        %v407 = vunpack.c.h.b16 %v314
        %v408 = vunpack.c.l.b16 %v315
        %v409 = vunpack.c.h.b16 %v315
        %v410 = vunpack.c.l.b16 %v316
        %v411 = vunpack.c.h.b16 %v316
        %v412 = vunpack.c.l.b16 %v317
        %v413 = vunpack.c.h.b16 %v317
        %v414 = vunpack.c.l.b16 %v318
        %v415 = vunpack.c.h.b16 %v318
        %v416 = vunpack.c.l.b16 %v319
        %v417 = vunpack.c.h.b16 %v319
        %v418 = vunpack.c.l.b16 %v320
        %v419 = vunpack.c.h.b16 %v320
        %v420 = vunpack.c.l.b16 %v321
        %v421 = vunpack.c.h.b16 %v321
        %v422 = vunpack.c.l.b16 %v322
        %v423 = vunpack.c.h.b16 %v322
        %v424 = vunpack.c.l.b16 %v323
        %v425 = vunpack.c.h.b16 %v323
        %v426 = vunpack.c.l.b16 %v324
        %v427 = vunpack.c.h.b16 %v324
        %v428 = vunpack.c.l.b16 %v325
        %v429 = vunpack.c.h.b16 %v325
        %v430 = vunpack.c.l.b16 %v326
        %v431 = vunpack.c.h.b16 %v326
        %v432 = vunpack.c.l.b16 %v327
        %v433 = vunpack.c.h.b16 %v327
        %v434 = vunpack.c.l.b16 %v328
        %v435 = vunpack.c.h.b16 %v328
        %v436 = vunpack.c.l.b16 %v329
        %v437 = vunpack.c.h.b16 %v329
        %v438 = vpack.c.b16 %v376, %v374
        %v439 = vpack.c.b16 %v377, %v375
        %v440 = vpack.c.b16 %v380, %v378
        %v441 = vpack.c.b16 %v381, %v379
        %v442 = vpack.c.b16 %v384, %v382
        %v443 = vpack.c.b16 %v385, %v383
        %v444 = vpack.c.b16 %v388, %v386
        %v445 = vpack.c.b16 %v389, %v387
        %v446 = vpack.c.b16 %v392, %v390
        %v447 = vpack.c.b16 %v393, %v391
        %v448 = vpack.c.b16 %v396, %v394
        %v449 = vpack.c.b16 %v397, %v395
        %v450 = vpack.c.b16 %v400, %v398
        %v451 = vpack.c.b16 %v401, %v399
        %v452 = vpack.c.b16 %v404, %v402
        %v453 = vpack.c.b16 %v405, %v403
        %v454 = vpack.c.b16 %v408, %v406
        %v455 = vpack.c.b16 %v409, %v407
        %v456 = vpack.c.b16 %v412, %v410
        %v457 = vpack.c.b16 %v413, %v411
        %v458 = vpack.c.b16 %v416, %v414
        %v459 = vpack.c.b16 %v417, %v415
        %v460 = vpack.c.b16 %v420, %v418
        %v461 = vpack.c.b16 %v421, %v419
        %v462 = vpack.c.b16 %v424, %v422
        %v463 = vpack.c.b16 %v425, %v423
        %v464 = vpack.c.b16 %v428, %v426
        %v465 = vpack.c.b16 %v429, %v427
        %v466 = vpack.c.b16 %v432, %v430
        %v467 = vpack.c.b16 %v433, %v431
        %v468 = vpack.c.b16 %v436, %v434
        %v469 = vpack.c.b16 %v437, %v435
        %502 = vmatprep.subr.bf16.mxu0 %v439
        %503 = vmatpush1.bf16.msra.mxu0 %v438
        %504 = vmatprep.subr.bf16.mxu0 %v441
        %505 = vmatpush1.bf16.msra.mxu0 %v440
        %506 = vmatprep.subr.bf16.mxu0 %v443
        %507 = vmatpush1.bf16.msra.mxu0 %v442
        %508 = vmatprep.subr.bf16.mxu0 %v445
        %509 = vmatpush1.bf16.msra.mxu0 %v444
        %510 = vmatprep.subr.bf16.mxu0 %v447
        %511 = vmatpush1.bf16.msra.mxu0 %v446
        %512 = vmatprep.subr.bf16.mxu0 %v449
        %513 = vmatpush1.bf16.msra.mxu0 %v448
        %514 = vmatprep.subr.bf16.mxu0 %v451
        %515 = vmatpush1.bf16.msra.mxu0 %v450
        %516 = vmatprep.subr.bf16.mxu0 %v453
        %517 = vmatpush1.bf16.msra.mxu0 %v452
        %518 = vmatprep.subr.bf16.mxu0 %v455
        %519 = vmatpush1.bf16.msra.mxu0 %v454
        %520 = vmatprep.subr.bf16.mxu0 %v457
        %521 = vmatpush1.bf16.msra.mxu0 %v456
        %522 = vmatprep.subr.bf16.mxu0 %v459
        %523 = vmatpush1.bf16.msra.mxu0 %v458
        %524 = vmatprep.subr.bf16.mxu0 %v461
        %525 = vmatpush1.bf16.msra.mxu0 %v460
        %526 = vmatprep.subr.bf16.mxu0 %v463
        %527 = vmatpush1.bf16.msra.mxu0 %v462
        %528 = vmatprep.subr.bf16.mxu0 %v465
        %529 = vmatpush1.bf16.msra.mxu0 %v464
        %530 = vmatprep.subr.bf16.mxu0 %v467
        %531 = vmatpush1.bf16.msra.mxu0 %v466
        %532 = vmatprep.subr.bf16.mxu0 %v469
        %533 = vmatpush1.bf16.msra.mxu0 %v468
        %534 = vmatprep.mubr.bf16.mxu0 %v283
        %535 = vmatmul.mubr.bf16.gmra.mrb[0].mxu0 %v282
        %v536 = vpop.f32.mrb[0].mxu0
        %v537 = vadd.f32 %v335, %v536
        %v538 = vpop.f32.mrb[0].mxu0
        %v539 = vadd.f32 %v339, %v538
        %v540 = vpop.f32.mrb[0].mxu0
        %v541 = vadd.f32 %v335, %v540
        %v542 = vpop.f32.mrb[0].mxu0
        %v543 = vadd.f32 %v339, %v542
        %544 = vmatprep.mubr.bf16.mxu0 %v285
        %545 = vmatmul.mubr.bf16.gmra.mrb[0].mxu0 %v284
        %v546 = vpop.f32.mrb[0].mxu0
        %v547 = vadd.f32 %v335, %v546
        %v548 = vpop.f32.mrb[0].mxu0
        %v549 = vadd.f32 %v339, %v548
        %v550 = vpop.f32.mrb[0].mxu0
        %v551 = vadd.f32 %v335, %v550
        %v552 = vpop.f32.mrb[0].mxu0
        %v553 = vadd.f32 %v339, %v552
        %554 = vmatprep.mubr.bf16.mxu0 %v287
        %555 = vmatmul.mubr.bf16.gmra.mrb[0].mxu0 %v286
        %v556 = vpop.f32.mrb[0].mxu0
        %v557 = vadd.f32 %v335, %v556
        %v558 = vpop.f32.mrb[0].mxu0
        %v559 = vadd.f32 %v339, %v558
        %v560 = vpop.f32.mrb[0].mxu0
        %v561 = vadd.f32 %v335, %v560
        %v562 = vpop.f32.mrb[0].mxu0
        %v563 = vadd.f32 %v339, %v562
        %564 = vmatprep.mubr.bf16.mxu0 %v289
        %565 = vmatmul.mubr.bf16.gmra.mrb[0].mxu0 %v288
        %v566 = vpop.f32.mrb[0].mxu0
        %v567 = vadd.f32 %v335, %v566
        %v568 = vpop.f32.mrb[0].mxu0
        %v569 = vadd.f32 %v339, %v568
        %v570 = vpop.f32.mrb[0].mxu0
        %v571 = vadd.f32 %v335, %v570
        %v572 = vpop.f32.mrb[0].mxu0
        %v573 = vadd.f32 %v339, %v572
        %574 = vmatprep.mubr.bf16.mxu0 %v291
        %575 = vmatmul.mubr.bf16.gmra.mrb[0].mxu0 %v290
        %v576 = vpop.f32.mrb[0].mxu0
        %v577 = vadd.f32 %v335, %v576
        %v578 = vpop.f32.mrb[0].mxu0
        %v579 = vadd.f32 %v339, %v578
        %v580 = vpop.f32.mrb[0].mxu0
        %v581 = vadd.f32 %v335, %v580
        %v582 = vpop.f32.mrb[0].mxu0
        %v583 = vadd.f32 %v339, %v582
        %584 = vmatprep.mubr.bf16.mxu0 %v293
        %585 = vmatmul.mubr.bf16.gmra.mrb[0].mxu0 %v292
        %v586 = vpop.f32.mrb[0].mxu0
        %v587 = vadd.f32 %v335, %v586
        %v588 = vpop.f32.mrb[0].mxu0
        %v589 = vadd.f32 %v339, %v588
        %v590 = vpop.f32.mrb[0].mxu0
        %v591 = vadd.f32 %v335, %v590
        %v592 = vpop.f32.mrb[0].mxu0
        %v593 = vadd.f32 %v339, %v592
        %594 = vmatprep.mubr.bf16.mxu0 %v295
        %595 = vmatmul.mubr.bf16.gmra.mrb[0].mxu0 %v294
        %v596 = vpop.f32.mrb[0].mxu0
        %v597 = vadd.f32 %v335, %v596
        %v598 = vpop.f32.mrb[0].mxu0
        %v599 = vadd.f32 %v339, %v598
        %v600 = vpop.f32.mrb[0].mxu0
        %v601 = vadd.f32 %v335, %v600
        %v602 = vpop.f32.mrb[0].mxu0
        %v603 = vadd.f32 %v339, %v602
        %604 = vmatprep.mubr.bf16.mxu0 %v297
        %605 = vmatmul.mubr.bf16.gmra.mrb[0].mxu0 %v296
        %v606 = vpop.f32.mrb[0].mxu0
        %v607 = vadd.f32 %v335, %v606
        %v608 = vpop.f32.mrb[0].mxu0
        %v609 = vadd.f32 %v339, %v608
        %v610 = vpop.f32.mrb[0].mxu0
        %v611 = vadd.f32 %v335, %v610
        %v612 = vpop.f32.mrb[0].mxu0
        %v613 = vadd.f32 %v339, %v612
        %614 = vdwg.mxu0
        %615 = vst [vmem:[%s240] sm:$0xff] %v537
        %616 = vst [vmem:[%s240 + $0x8] sm:$0xff] %v539
        %617 = vst [vmem:[%s240 + $0x10] sm:$0xff] %v541
        %618 = vst [vmem:[%s240 + $0x18] sm:$0xff] %v543
        %619 = vst [vmem:[%s240 + $0x20] sm:$0xff] %v547
        %620 = vst [vmem:[%s240 + $0x28] sm:$0xff] %v549
        %621 = vst [vmem:[%s240 + $0x30] sm:$0xff] %v551
        %622 = vst [vmem:[%s240 + $0x38] sm:$0xff] %v553
        %623 = vst [vmem:[%s240 + $0x40] sm:$0xff] %v557
        %624 = vst [vmem:[%s240 + $0x48] sm:$0xff] %v559
        %625 = vst [vmem:[%s240 + $0x50] sm:$0xff] %v561
        %626 = vst [vmem:[%s240 + $0x58] sm:$0xff] %v563
        %627 = vst [vmem:[%s240 + $0x60] sm:$0xff] %v567
        %628 = vst [vmem:[%s240 + $0x68] sm:$0xff] %v569
        %629 = vst [vmem:[%s240 + $0x70] sm:$0xff] %v571
        %630 = vst [vmem:[%s240 + $0x78] sm:$0xff] %v573
        %631 = vst [vmem:[%s240 + $0x80] sm:$0xff] %v577
        %632 = vst [vmem:[%s240 + $0x88] sm:$0xff] %v579
        %633 = vst [vmem:[%s240 + $0x90] sm:$0xff] %v581
        %634 = vst [vmem:[%s240 + $0x98] sm:$0xff] %v583
        %635 = vst [vmem:[%s240 + $0xa0] sm:$0xff] %v587
        %636 = vst [vmem:[%s240 + $0xa8] sm:$0xff] %v589
        %637 = vst [vmem:[%s240 + $0xb0] sm:$0xff] %v591
        %638 = vst [vmem:[%s240 + $0xb8] sm:$0xff] %v593
        %639 = vst [vmem:[%s240 + $0xc0] sm:$0xff] %v597
        %640 = vst [vmem:[%s240 + $0xc8] sm:$0xff] %v599
        %641 = vst [vmem:[%s240 + $0xd0] sm:$0xff] %v601
        %642 = vst [vmem:[%s240 + $0xd8] sm:$0xff] %v603
        %643 = vst [vmem:[%s240 + $0xe0] sm:$0xff] %v607
        %644 = vst [vmem:[%s240 + $0xe8] sm:$0xff] %v609
        %645 = vst [vmem:[%s240 + $0xf0] sm:$0xff] %v611
        %646 = vst [vmem:[%s240 + $0xf8] sm:$0xff] %v613
        %s647 = sand.u32 %s121, 1
        %s648 = scalar_lea.sflag [#allocation4], %s647
        %s649 = sand.u32 %s121, 1
        %s650 = smul.addr %s649, 256
        %s651 = scalar_lea.vmem [#allocation7], %s650
        // Predicated region
        $region41: #{tpu_custom_call.1} parent=31 // pred_check
          %p652 = pneg %p131
        $region42: #{tpu_custom_call.1} parent=31 // pred_check_branch
          %654 = sbr.rel (%p652) target = $region44
        $region43: #{tpu_custom_call.1} parent=31 // pred_region
          %s655 = smul.u32 16, %s25
          %s656 = smul.u32 2, %s26
          %s658 = ssub.s32 4096, 4096
          %659 = vsyncadd %s648, %s658
          %s660 = smul.addr %s655, 2
          %s661 = sadd.s32 %s656, %s660
          %s662 = smul.addr %s661, 128
          %s663 = scalar_lea.hbm %s3, %s662
          %s664 = sshll.u32 %s651, 4
          %s665 = int_to_ptr.vmem [resolvable:$true] %s664
          %670 = dma.vmem_to_hbm [thread:$0]  %s665, 4096, %s663, %s648, 256, 256, 16
        $region44: #{tpu_custom_call.1} parent=31 // pred_fallthru
          _
      $region32: #{tpu_custom_call.1} parent=5 // pred_fallthru
        _
      %p671 = scmp.le.s32.totalorder 2, %s16
      // Predicated region
      $region45: #{tpu_custom_call.1} parent=5 // pred_check
        %p672 = pneg %p671
      $region46: #{tpu_custom_call.1} parent=5 // pred_check_branch
        %674 = sbr.rel (%p672) target = $region48
      $region47: #{tpu_custom_call.1} parent=5 // pred_region
        %s675 = ssub.s32 %s16, 2
        // Predicated region
        $region49: #{tpu_custom_call.1} parent=47 // pred_check
          %p676 = pneg %p137
        $region50: #{tpu_custom_call.1} parent=47 // pred_check_branch
          %678 = sbr.rel (%p676) target = $region52
        $region51: #{tpu_custom_call.1} parent=47 // pred_region
          %s679 = sand.u32 %s122, 1
          %s680 = scalar_lea.sflag [#allocation4], %s679
          %s681 = sand.u32 %s122, 1
          %s682 = smul.addr %s681, 256
          %s683 = scalar_lea.vmem [#allocation7], %s682
          %684 = dma.done %s680, 4096
        $region52: #{tpu_custom_call.1} parent=47 // pred_fallthru
          _
      $region48: #{tpu_custom_call.1} parent=5 // pred_fallthru
        _
    $region6: #{tpu_custom_call.1} parent=1 // loop_footer
      %s20 = sadd.s32 1, %s16
    $region7: #{tpu_custom_call.1} parent=1 // loop_footer_branch
      %15 = sbr.rel target = $region3
    $region8: #{tpu_custom_call.1} parent=1 // loop_exit
      _
    %685 = vsyncpa [#allocation3], 1
    %s686 = scalar_lea.sflag [#allocation3], 1
    %687 = vsyncpa %s686, 1
    %688 = vsyncpa [#allocation6], 1
    %689 = vsyncpa [#allocation4], 1
    %s690 = scalar_lea.sflag [#allocation4], 1
    %691 = vsyncpa %s690, 1

</llo_original>
